<compile_context>
chip_gen: v6e
topology: v6e:2x2x1
jax: 0.10.0
libtpu: 0.0.40
codegen_flags: <defaults>
</compile_context>

<pallas_src>
import functools

import jax
import jax.numpy as jnp
from jax import lax
from jax.experimental import pallas as pl
from jax.experimental.pallas import tpu as pltpu


def _attention_head_kernel(q_ref, k_ref, v_ref, mask_ref, w_ref, b_ref, o_ref,
                           *, scale, dh_pad):
    q = q_ref[0]        # [tq, d_model]
    k = k_ref[0]        # [S,  d_model]
    v = v_ref[0]        # [S,  d_model]
    mask = mask_ref[0]  # [tq, S]

    in_dtype = q.dtype

    # Fused (lane-aligned) weight/bias views: [wq | wk | wv].
    wq = w_ref[:, 0 * dh_pad:1 * dh_pad]
    wk = w_ref[:, 1 * dh_pad:2 * dh_pad]
    wv = w_ref[:, 2 * dh_pad:3 * dh_pad]
    bq = b_ref[:, 0 * dh_pad:1 * dh_pad]
    bk = b_ref[:, 1 * dh_pad:2 * dh_pad]
    bv = b_ref[:, 2 * dh_pad:3 * dh_pad]

    # Projections (MXU), f32 accumulation.  The softmax scale is folded into
    # qp (tq*dh elements, not tq*S).  Cast back to the input dtype so bf16
    # inputs keep bf16 MXU operands for the attention matmuls.
    qp = ((jnp.dot(q, wq, preferred_element_type=jnp.float32) + bq) * scale
          ).astype(in_dtype)
    kp = (jnp.dot(k, wk, preferred_element_type=jnp.float32) + bk).astype(in_dtype)
    vp = (jnp.dot(v, wv, preferred_element_type=jnp.float32) + bv).astype(in_dtype)

    # Scores: contract the last dims directly (no kp.T / XLU transpose).
    s = lax.dot_general(qp, kp, (((1,), (1,)), ((), ())),
                        preferred_element_type=jnp.float32)
    s = s + mask.astype(jnp.float32)

    # Numerically stable softmax; denominator reciprocal on the EUP slot.
    s = s - jnp.max(s, axis=-1, keepdims=True)
    p = jnp.exp(s)
    p = p * pl.reciprocal(jnp.sum(p, axis=-1, keepdims=True), approx=True)

    out = jnp.dot(p.astype(vp.dtype), vp, preferred_element_type=jnp.float32)
    o_ref[0] = out.astype(o_ref.dtype)


def attention_head(q, k, v, mask, wq, bq, wk, bk, wv, bv, *, q_tile=None):
    """q/k/v: [B, S, d_model], mask: [B, S, S], w*: [d_model, dim_head], b*: [dim_head]."""
    B, S, d_model = q.shape
    dim_head = wq.shape[1]
    scale = float(dim_head) ** -0.5

    # Pad the head dim to a multiple of 128 (lane-dense MXU N-dim and output).
    dh_pad = ((dim_head + 127) // 128) * 128

    def pad_w(w):
        return w if w.shape[1] == dh_pad else jnp.pad(w, ((0, 0), (0, dh_pad - w.shape[1])))

    def pad_b(b):
        return b if b.shape[0] == dh_pad else jnp.pad(b, ((0, dh_pad - b.shape[0]),))

    w_fused = jnp.concatenate([pad_w(wq), pad_w(wk), pad_w(wv)], axis=1)         # [d_model, 3*dh_pad]
    b_fused = jnp.concatenate([pad_b(bq), pad_b(bk), pad_b(bv)]).reshape(1, 3 * dh_pad)

    # Query tiling: bounds live score state to [tq, S] and gives extra
    # independent grid work.
    if q_tile is None:
        q_tile = S if S <= 512 else 512
    if S % q_tile != 0:
        q_tile = S
    n_q_tiles = S // q_tile

    q_spec = pl.BlockSpec((1, q_tile, d_model), lambda b, qi: (b, qi, 0))
    kv_spec = pl.BlockSpec((1, S, d_model), lambda b, qi: (b, 0, 0))
    mask_spec = pl.BlockSpec((1, q_tile, S), lambda b, qi: (b, qi, 0))
    w_spec = pl.BlockSpec((d_model, 3 * dh_pad), lambda b, qi: (0, 0))
    bias_spec = pl.BlockSpec((1, 3 * dh_pad), lambda b, qi: (0, 0))
    out_spec = pl.BlockSpec((1, q_tile, dh_pad), lambda b, qi: (b, qi, 0))

    kernel = functools.partial(_attention_head_kernel, scale=scale, dh_pad=dh_pad)

    out = pl.pallas_call(
        kernel,
        out_shape=jax.ShapeDtypeStruct((B, S, dh_pad), q.dtype),
        grid_spec=pltpu.PrefetchScalarGridSpec(
            num_scalar_prefetch=0,
            grid=(B, n_q_tiles),
            in_specs=[q_spec, kv_spec, kv_spec, mask_spec, w_spec, bias_spec],
            out_specs=out_spec,
        ),
        compiler_params=pltpu.CompilerParams(
            dimension_semantics=("parallel", "parallel")),
    )(q, k, v, mask, w_fused, b_fused)

    return out[..., :dim_head] if dh_pad != dim_head else out


def _reference(q, k, v, mask, wq, bq, wk, bk, wv, bv, scale):
    qp = q @ wq + bq
    kp = k @ wk + bk
    vp = v @ wv + bv
    attn = jnp.einsum("bqd,bkd->bqk", qp, kp) * scale + mask
    attn = jax.nn.softmax(attn, axis=-1)
    return jnp.einsum("bqk,bkd->bqd", attn, vp)


if __name__ == "__main__":
    B, S, d_model, dim_head = 2, 8, 32, 16

    key = jax.random.PRNGKey(0)
    k_q, k_k, k_v, k_m, k_wq, k_bq, k_wk, k_bk, k_wv, k_bv = jax.random.split(key, 10)

    q = jax.random.normal(k_q, (B, S, d_model), dtype=jnp.float32)
    k = jax.random.normal(k_k, (B, S, d_model), dtype=jnp.float32)
    v = jax.random.normal(k_v, (B, S, d_model), dtype=jnp.float32)
    # Additive attention mask (0 / -inf style); small random values here.
    mask = jax.random.normal(k_m, (B, S, S), dtype=jnp.float32) * 0.1

    # Deterministic parameter init (mirrors nn.Linear shapes, pre-transposed).
    init = 1.0 / (d_model ** 0.5)
    wq = jax.random.uniform(k_wq, (d_model, dim_head), minval=-init, maxval=init)
    bq = jax.random.uniform(k_bq, (dim_head,), minval=-init, maxval=init)
    wk = jax.random.uniform(k_wk, (d_model, dim_head), minval=-init, maxval=init)
    bk = jax.random.uniform(k_bk, (dim_head,), minval=-init, maxval=init)
    wv = jax.random.uniform(k_wv, (d_model, dim_head), minval=-init, maxval=init)
    bv = jax.random.uniform(k_bv, (dim_head,), minval=-init, maxval=init)

    out = attention_head(q, k, v, mask, wq, bq, wk, bk, wv, bv)
    out = jax.block_until_ready(out)

    ref = _reference(q, k, v, mask, wq, bq, wk, bk, wv, bv, dim_head ** -0.5)
    assert out.shape == (B, S, dim_head)
    # Slightly relaxed tolerance: approx (EUP) reciprocal in the softmax.
    assert jnp.allclose(out, ref, atol=2e-3, rtol=2e-3), "mismatch vs reference"

    print("KERNEL_OK")
</pallas_src>

<mosaic_0001>
module attributes {stable_mosaic.version = 11 : i64} {
  func.func @_attention_head_kernel(%arg0: i32, %arg1: i32, %arg2: memref<1x8x32xf32, #tpu.memory_space<vmem>>, %arg3: memref<1x8x32xf32, #tpu.memory_space<vmem>>, %arg4: memref<1x8x32xf32, #tpu.memory_space<vmem>>, %arg5: memref<1x8x8xf32, #tpu.memory_space<vmem>>, %arg6: memref<32x384xf32, #tpu.memory_space<vmem>>, %arg7: memref<1x384xf32, #tpu.memory_space<vmem>>, %arg8: memref<1x8x128xf32, #tpu.memory_space<vmem>>) attributes {dimension_semantics = [#tpu.dimension_semantics<parallel>, #tpu.dimension_semantics<parallel>], iteration_bounds = array<i64: 2, 1>, scalar_prefetch = 0 : i64, scratch_operands = 0 : i64, tpu.core_type = #tpu.core_type<tc>, window_params = [{transform_indices = @transform_0, window_bounds = array<i64: 1, 8, 32>}, {transform_indices = @transform_1, window_bounds = array<i64: 1, 8, 32>}, {transform_indices = @transform_2, window_bounds = array<i64: 1, 8, 32>}, {transform_indices = @transform_3, window_bounds = array<i64: 1, 8, 8>}, {pipeline_mode = #tpu.pipeline_mode<synchronous>, transform_indices = @transform_4, window_bounds = array<i64: 32, 384>}, {pipeline_mode = #tpu.pipeline_mode<synchronous>, transform_indices = @transform_5, window_bounds = array<i64: 1, 384>}, {transform_indices = @transform_6, window_bounds = array<i64: 1, 8, 128>}]} {
    %c0 = arith.constant 0 : index
    %c0_0 = arith.constant 0 : index
    %c0_1 = arith.constant 0 : index
    %0 = vector.load %arg2[%c0, %c0_0, %c0_1] : memref<1x8x32xf32, #tpu.memory_space<vmem>>, vector<1x8x32xf32>
    %1 = vector.shape_cast %0 : vector<1x8x32xf32> to vector<8x32xf32>
    %c0_2 = arith.constant 0 : index
    %c0_3 = arith.constant 0 : index
    %c0_4 = arith.constant 0 : index
    %2 = vector.load %arg3[%c0_2, %c0_3, %c0_4] : memref<1x8x32xf32, #tpu.memory_space<vmem>>, vector<1x8x32xf32>
    %3 = vector.shape_cast %2 : vector<1x8x32xf32> to vector<8x32xf32>
    %c0_5 = arith.constant 0 : index
    %c0_6 = arith.constant 0 : index
    %c0_7 = arith.constant 0 : index
    %4 = vector.load %arg4[%c0_5, %c0_6, %c0_7] : memref<1x8x32xf32, #tpu.memory_space<vmem>>, vector<1x8x32xf32>
    %5 = vector.shape_cast %4 : vector<1x8x32xf32> to vector<8x32xf32>
    %c0_8 = arith.constant 0 : index
    %c0_9 = arith.constant 0 : index
    %c0_10 = arith.constant 0 : index
    %6 = vector.load %arg5[%c0_8, %c0_9, %c0_10] : memref<1x8x8xf32, #tpu.memory_space<vmem>>, vector<1x8x8xf32>
    %7 = vector.shape_cast %6 : vector<1x8x8xf32> to vector<8x8xf32>
    %c0_11 = arith.constant 0 : index
    %c0_12 = arith.constant 0 : index
    %8 = vector.load %arg6[%c0_11, %c0_12] : memref<32x384xf32, #tpu.memory_space<vmem>>, vector<32x128xf32>
    %c0_13 = arith.constant 0 : index
    %c128 = arith.constant 128 : index
    %9 = vector.load %arg6[%c0_13, %c128] : memref<32x384xf32, #tpu.memory_space<vmem>>, vector<32x128xf32>
    %c0_14 = arith.constant 0 : index
    %c256 = arith.constant 256 : index
    %10 = vector.load %arg6[%c0_14, %c256] : memref<32x384xf32, #tpu.memory_space<vmem>>, vector<32x128xf32>
    %c0_15 = arith.constant 0 : index
    %c0_16 = arith.constant 0 : index
    %11 = vector.load %arg7[%c0_15, %c0_16] : memref<1x384xf32, #tpu.memory_space<vmem>>, vector<1x128xf32>
    %c0_17 = arith.constant 0 : index
    %c128_18 = arith.constant 128 : index
    %12 = vector.load %arg7[%c0_17, %c128_18] : memref<1x384xf32, #tpu.memory_space<vmem>>, vector<1x128xf32>
    %c0_19 = arith.constant 0 : index
    %c256_20 = arith.constant 256 : index
    %13 = vector.load %arg7[%c0_19, %c256_20] : memref<1x384xf32, #tpu.memory_space<vmem>>, vector<1x128xf32>
    %cst = arith.constant dense<0.000000e+00> : vector<8x128xf32>
    %14 = tpu.matmul %1, %8, %cst {dimension_numbers = #tpu.dot_dimension_numbers<[1], [0], [0], [1], [0, 0, 1, 1], [], []>} : vector<8x32xf32>, vector<32x128xf32>, vector<8x128xf32> -> vector<8x128xf32>
    %15 = vector.broadcast %11 : vector<1x128xf32> to vector<8x128xf32>
    %16 = arith.addf %14, %15 : vector<8x128xf32>
    %cst_21 = arith.constant 2.500000e-01 : f32
    %17 = vector.broadcast %cst_21 : f32 to vector<8x128xf32>
    %18 = arith.mulf %16, %17 : vector<8x128xf32>
    %cst_22 = arith.constant dense<0.000000e+00> : vector<8x128xf32>
    %19 = tpu.matmul %3, %9, %cst_22 {dimension_numbers = #tpu.dot_dimension_numbers<[1], [0], [0], [1], [0, 0, 1, 1], [], []>} : vector<8x32xf32>, vector<32x128xf32>, vector<8x128xf32> -> vector<8x128xf32>
    %20 = vector.broadcast %12 : vector<1x128xf32> to vector<8x128xf32>
    %21 = arith.addf %19, %20 : vector<8x128xf32>
    %cst_23 = arith.constant dense<0.000000e+00> : vector<8x128xf32>
    %22 = tpu.matmul %5, %10, %cst_23 {dimension_numbers = #tpu.dot_dimension_numbers<[1], [0], [0], [1], [0, 0, 1, 1], [], []>} : vector<8x32xf32>, vector<32x128xf32>, vector<8x128xf32> -> vector<8x128xf32>
    %23 = vector.broadcast %13 : vector<1x128xf32> to vector<8x128xf32>
    %24 = arith.addf %22, %23 : vector<8x128xf32>
    %cst_24 = arith.constant dense<0.000000e+00> : vector<8x8xf32>
    %25 = tpu.matmul %18, %21, %cst_24 {dimension_numbers = #tpu.dot_dimension_numbers<[1], [1], [0], [0], [0, 0, 1, 0], [], []>} : vector<8x128xf32>, vector<8x128xf32>, vector<8x8xf32> -> vector<8x8xf32>
    %26 = arith.addf %25, %7 : vector<8x8xf32>
    %cst_25 = arith.constant dense<0xFF800000> : vector<8xf32>
    %27 = vector.multi_reduction <maximumf>, %26, %cst_25 [1] : vector<8x8xf32> to vector<8xf32>
    %28 = vector.shape_cast %27 : vector<8xf32> to vector<8x1xf32>
    %29 = vector.broadcast %28 : vector<8x1xf32> to vector<8x8xf32>
    %30 = arith.subf %26, %29 : vector<8x8xf32>
    %31 = math.exp %30 : vector<8x8xf32>
    %cst_26 = arith.constant dense<0.000000e+00> : vector<8xf32>
    %32 = vector.multi_reduction <add>, %31, %cst_26 [1] : vector<8x8xf32> to vector<8xf32>
    %33 = vector.shape_cast %32 : vector<8xf32> to vector<8x1xf32>
    %34 = tpu.reciprocal %33 {approx = true} : vector<8x1xf32> -> vector<8x1xf32>
    %35 = vector.broadcast %34 : vector<8x1xf32> to vector<8x8xf32>
    %36 = arith.mulf %31, %35 : vector<8x8xf32>
    %cst_27 = arith.constant dense<0.000000e+00> : vector<8x128xf32>
    %37 = tpu.matmul %36, %24, %cst_27 {dimension_numbers = #tpu.dot_dimension_numbers<[1], [0], [0], [1], [0, 0, 1, 1], [], []>} : vector<8x8xf32>, vector<8x128xf32>, vector<8x128xf32> -> vector<8x128xf32>
    %c0_28 = arith.constant 0 : index
    %c0_29 = arith.constant 0 : index
    %c0_30 = arith.constant 0 : index
    %38 = vector.load %arg8[%c0_28, %c0_29, %c0_30] : memref<1x8x128xf32, #tpu.memory_space<vmem>>, vector<1x8x128xf32>
    %39 = vector.shape_cast %38 : vector<1x8x128xf32> to vector<8x128xf32>
    %40 = vector.shape_cast %37 : vector<8x128xf32> to vector<1x8x128xf32>
    tpu.vector_store %arg8[%c0_28, %c0_29, %c0_30], %40 {strides = array<i32>} : memref<1x8x128xf32, #tpu.memory_space<vmem>>, vector<1x8x128xf32>,
    return
  }
  func.func @transform_0(%arg0: i32, %arg1: i32) -> (i32, i32, i32) {
    %c0_i32 = arith.constant 0 : i32
    %c0_i32_0 = arith.constant 0 : i32
    return %arg0, %arg1, %c0_i32 : i32, i32, i32
  }
  func.func @transform_1(%arg0: i32, %arg1: i32) -> (i32, i32, i32) {
    %c0_i32 = arith.constant 0 : i32
    %c0_i32_0 = arith.constant 0 : i32
    %c0_i32_1 = arith.constant 0 : i32
    return %arg0, %c0_i32, %c0_i32_0 : i32, i32, i32
  }
  func.func @transform_2(%arg0: i32, %arg1: i32) -> (i32, i32, i32) {
    %c0_i32 = arith.constant 0 : i32
    %c0_i32_0 = arith.constant 0 : i32
    %c0_i32_1 = arith.constant 0 : i32
    return %arg0, %c0_i32, %c0_i32_0 : i32, i32, i32
  }
  func.func @transform_3(%arg0: i32, %arg1: i32) -> (i32, i32, i32) {
    %c0_i32 = arith.constant 0 : i32
    %c0_i32_0 = arith.constant 0 : i32
    return %arg0, %arg1, %c0_i32 : i32, i32, i32
  }
  func.func @transform_4(%arg0: i32, %arg1: i32) -> (i32, i32) {
    %c0_i32 = arith.constant 0 : i32
    %c0_i32_0 = arith.constant 0 : i32
    %c0_i32_1 = arith.constant 0 : i32
    return %c0_i32, %c0_i32_0 : i32, i32
  }
  func.func @transform_5(%arg0: i32, %arg1: i32) -> (i32, i32) {
    %c0_i32 = arith.constant 0 : i32
    %c0_i32_0 = arith.constant 0 : i32
    %c0_i32_1 = arith.constant 0 : i32
    return %c0_i32, %c0_i32_0 : i32, i32
  }
  func.func @transform_6(%arg0: i32, %arg1: i32) -> (i32, i32, i32) {
    %c0_i32 = arith.constant 0 : i32
    %c0_i32_0 = arith.constant 0 : i32
    return %arg0, %arg1, %c0_i32 : i32, i32, i32
  }
}

</mosaic_0001>

<llo_original>
// kernel: tpu_custom_call.1
$region0: #{tpu_custom_call.1}
  #allocation0 [shape = 'u32[]', space=smem, size = 0x4, offset = 0x4, fixed_abs, tag = 'smem constant byte address 0x4 - core index']
  #allocation1 [shape = 'u32[144,128]{1,0:T(1,128)}', space=vmem, size = 0x12000, scoped, tag = 'internal scratch']
  %s0 = inlined_call_operand.hbm [shape: f32[2,8,32], index: 0, kind: input, shape index: {}]
  %s1 = inlined_call_operand.hbm [shape: f32[2,8,32], index: 1, kind: input, shape index: {}]
  %s2 = inlined_call_operand.hbm [shape: f32[2,8,32], index: 2, kind: input, shape index: {}]
  %s3 = inlined_call_operand.hbm [shape: f32[2,8,8], index: 3, kind: input, shape index: {}]
  %s4 = inlined_call_operand.hbm [shape: f32[32,384], index: 4, kind: input, shape index: {}]
  %s5 = inlined_call_operand.vmem [shape: f32[1,384], index: 5, kind: input, shape index: {}]
  %s6 = inlined_call_operand.hbm [shape: f32[2,8,128], index: 6, kind: output, shape index: {}]
  %s7 = sld [smem:[#allocation0]]
  $region77: #{tpu_custom_call.1} parent=0
    _
  %s9 = ssub.s32 1, %s7
  %s10 = scalar_select 0, %s9, %s7
  $region1: #{tpu_custom_call.1} parent=0
    #allocation2 [shape = 'u8[8192]{0}', space=vmem, size = 0x2000, scoped, tag = 'input window, operand 0']
    #allocation3 [shape = 's32[2]{0}', space=sflag, size = 0x8, scoped, tag = 'scoped memory for tpu_custom_call.1']
    #allocation4 [shape = 's32[2]{0}', space=sflag, size = 0x8, scoped, tag = 'scoped memory for tpu_custom_call.1']
    #allocation5 [shape = 'u8[8192]{0}', space=vmem, size = 0x2000, scoped, tag = 'input window, operand 1']
    #allocation6 [shape = 's32[2]{0}', space=sflag, size = 0x8, scoped, tag = 'scoped memory for tpu_custom_call.1']
    #allocation7 [shape = 'u8[8192]{0}', space=vmem, size = 0x2000, scoped, tag = 'input window, operand 2']
    #allocation8 [shape = 'u8[8192]{0}', space=vmem, size = 0x2000, scoped, tag = 'input window, operand 3']
    #allocation9 [shape = 's32[2]{0}', space=sflag, size = 0x8, scoped, tag = 'scoped memory for tpu_custom_call.1']
    #allocation10 [shape = 'u8[49152]{0}', space=vmem, size = 0xc000, scoped, tag = 'input window, operand 4, single buffered']
    #allocation11 [shape = 'u8[8192]{0}', space=vmem, size = 0x2000, scoped, tag = 'output window, operand 0']
    %11 = vsyncpa [#allocation3], 0
    %s12 = scalar_lea.sflag [#allocation3], 1
    %13 = vsyncpa %s12, 0
    %14 = vsyncpa [#allocation6], 0
    %s15 = scalar_lea.sflag [#allocation6], 1
    %16 = vsyncpa %s15, 0
    %17 = vsyncpa [#allocation9], 0
    %s18 = scalar_lea.sflag [#allocation9], 1
    %19 = vsyncpa %s18, 0
    %20 = vsyncpa [#allocation4], 0
    %s21 = scalar_lea.sflag [#allocation4], 1
    %22 = vsyncpa %s21, 0
    loop: start=0, step=1, limit=4
    $region2: #{tpu_custom_call.1} parent=1 // loop_pre_header
      _
    $region3: #{tpu_custom_call.1} parent=1 // loop_header
      %s24 = sphi 0, %s28
      %p25 = scmp.ge.s32.totalorder %s24, 4
      %s31 = sphi 0, %s43
      %s32 = sphi 0, %s39
      %s33 = sphi 0, %s31
      %s34 = sphi 0, %s32
      %s35 = sphi 0, %s33
      %s36 = sphi 0, %s34
      %s48 = sphi 0, %s50
      %s51 = sphi 0, %s48
      %s52 = sphi 0, %s51
      %s68 = sphi 0, %s52
      %s74 = sphi 0, %s76
      %s77 = sphi 0, %s74
      %s78 = sphi 0, %s77
      %s94 = sphi 0, %s78
      %s100 = sphi 0, %s102
      %s103 = sphi 0, %s100
      %s104 = sphi 0, %s103
      %s120 = sphi 0, %s104
      %s128 = sphi 0, %s130
      %s131 = sphi 0, %s128
      %s132 = sphi 0, %s131
      %s148 = sphi 0, %s132
      %s152 = sphi 0, %s152
      %s154 = sphi 0, %s152
      %s155 = sphi 0, %s154
      %s169 = sphi 0, %s155
      %s173 = sphi 0, %s173
      %s175 = sphi 0, %s173
      %s176 = sphi 0, %s175
      %s190 = sphi 0, %s176
      %s198 = sphi 0, %s200
      %s201 = sphi 0, %s198
      %s202 = sphi 0, %s201
      %s218 = sphi 0, %s202
    $region4: #{tpu_custom_call.1} parent=1 // loop_header_branch
      %27 = sbr.rel (%p25) target = $region8
    $region5: #{tpu_custom_call.1} parent=1 // loop_body
      %s29 = ssub.s32 %s24, 1
      %s30 = ssub.s32 %s24, 2
      %s37 = sadd.s32 1, %s32
      %p38 = scmp.ge.s32.totalorder %s37, 1
      %s39 = scalar_select %p38, 0, %s37
      %s40 = sadd.s32 1, %s31
      %s41 = scalar_select %p38, %s40, %s31
      %p42 = scmp.ge.s32.totalorder %s41, 2
      %s43 = scalar_select %p42, 0, %s41
      %s44 = ssub.s32 %s31, %s43
      %s45 = ssub.s32 %s32, %s39
      %s46 = sor.u32 %s44, %s45
      %p47 = scmp.eq.s32.totalorder %s46, 0
      %s49 = sadd.s32 %s48, 1
      %s50 = scalar_select %p47, %s48, %s49
      %p53 = pneg %p47
      %p54 = scmp.eq.s32.totalorder %s24, 1
      %p55 = por %p53, %p54
      %p56 = scmp.ne.s32.totalorder %s48, %s51
      %p57 = scmp.eq.s32.totalorder %s24, 0
      %p58 = por %p56, %p57
      %p59 = scmp.ne.s32.totalorder %s48, %s51
      %p60 = scmp.eq.s32.totalorder %s29, 1
      %p61 = por %p59, %p60
      %p62 = scmp.ne.s32.totalorder %s51, %s52
      %p63 = scmp.eq.s32.totalorder %s29, 0
      %p64 = por %p62, %p63
      %p65 = scmp.ne.s32.totalorder %s51, %s52
      %p66 = scmp.eq.s32.totalorder %s30, 1
      %p67 = por %p65, %p66
      %p69 = scmp.ne.s32.totalorder %s52, %s68
      %p70 = scmp.eq.s32.totalorder %s30, 0
      %p71 = por %p69, %p70
      %s72 = ssub.s32 %s31, %s43
      %p73 = scmp.eq.s32.totalorder %s72, 0
      %s75 = sadd.s32 %s74, 1
      %s76 = scalar_select %p73, %s74, %s75
      %p79 = pneg %p73
      %p80 = scmp.eq.s32.totalorder %s24, 1
      %p81 = por %p79, %p80
      %p82 = scmp.ne.s32.totalorder %s74, %s77
      %p83 = scmp.eq.s32.totalorder %s24, 0
      %p84 = por %p82, %p83
      %p85 = scmp.ne.s32.totalorder %s74, %s77
      %p86 = scmp.eq.s32.totalorder %s29, 1
      %p87 = por %p85, %p86
      %p88 = scmp.ne.s32.totalorder %s77, %s78
      %p89 = scmp.eq.s32.totalorder %s29, 0
      %p90 = por %p88, %p89
      %p91 = scmp.ne.s32.totalorder %s77, %s78
      %p92 = scmp.eq.s32.totalorder %s30, 1
      %p93 = por %p91, %p92
      %p95 = scmp.ne.s32.totalorder %s78, %s94
      %p96 = scmp.eq.s32.totalorder %s30, 0
      %p97 = por %p95, %p96
      %s98 = ssub.s32 %s31, %s43
      %p99 = scmp.eq.s32.totalorder %s98, 0
      %s101 = sadd.s32 %s100, 1
      %s102 = scalar_select %p99, %s100, %s101
      %p105 = pneg %p99
      %p106 = scmp.eq.s32.totalorder %s24, 1
      %p107 = por %p105, %p106
      %p108 = scmp.ne.s32.totalorder %s100, %s103
      %p109 = scmp.eq.s32.totalorder %s24, 0
      %p110 = por %p108, %p109
      %p111 = scmp.ne.s32.totalorder %s100, %s103
      %p112 = scmp.eq.s32.totalorder %s29, 1
      %p113 = por %p111, %p112
      %p114 = scmp.ne.s32.totalorder %s103, %s104
      %p115 = scmp.eq.s32.totalorder %s29, 0
      %p116 = por %p114, %p115
      %p117 = scmp.ne.s32.totalorder %s103, %s104
      %p118 = scmp.eq.s32.totalorder %s30, 1
      %p119 = por %p117, %p118
      %p121 = scmp.ne.s32.totalorder %s104, %s120
      %p122 = scmp.eq.s32.totalorder %s30, 0
      %p123 = por %p121, %p122
      %s124 = ssub.s32 %s31, %s43
      %s125 = ssub.s32 %s32, %s39
      %s126 = sor.u32 %s124, %s125
      %p127 = scmp.eq.s32.totalorder %s126, 0
      %s129 = sadd.s32 %s128, 1
      %s130 = scalar_select %p127, %s128, %s129
      %p133 = pneg %p127
      %p134 = scmp.eq.s32.totalorder %s24, 1
      %p135 = por %p133, %p134
      %p136 = scmp.ne.s32.totalorder %s128, %s131
      %p137 = scmp.eq.s32.totalorder %s24, 0
      %p138 = por %p136, %p137
      %p139 = scmp.ne.s32.totalorder %s128, %s131
      %p140 = scmp.eq.s32.totalorder %s29, 1
      %p141 = por %p139, %p140
      %p142 = scmp.ne.s32.totalorder %s131, %s132
      %p143 = scmp.eq.s32.totalorder %s29, 0
      %p144 = por %p142, %p143
      %p145 = scmp.ne.s32.totalorder %s131, %s132
      %p146 = scmp.eq.s32.totalorder %s30, 1
      %p147 = por %p145, %p146
      %p149 = scmp.ne.s32.totalorder %s132, %s148
      %p150 = scmp.eq.s32.totalorder %s30, 0
      %p151 = por %p149, %p150
      %s153 = sadd.s32 %s152, 1
      %p156 = scmp.eq.s32.totalorder %s24, 1
      %p157 = scmp.ne.s32.totalorder %s152, %s154
      %p158 = scmp.eq.s32.totalorder %s24, 0
      %p159 = por %p157, %p158
      %p160 = scmp.ne.s32.totalorder %s152, %s154
      %p161 = scmp.eq.s32.totalorder %s29, 1
      %p162 = por %p160, %p161
      %p163 = scmp.ne.s32.totalorder %s154, %s155
      %p164 = scmp.eq.s32.totalorder %s29, 0
      %p165 = por %p163, %p164
      %p166 = scmp.ne.s32.totalorder %s154, %s155
      %p167 = scmp.eq.s32.totalorder %s30, 1
      %p168 = por %p166, %p167
      %p170 = scmp.ne.s32.totalorder %s155, %s169
      %p171 = scmp.eq.s32.totalorder %s30, 0
      %p172 = por %p170, %p171
      %s174 = sadd.s32 %s173, 1
      %p177 = scmp.eq.s32.totalorder %s24, 1
      %p178 = scmp.ne.s32.totalorder %s173, %s175
      %p179 = scmp.eq.s32.totalorder %s24, 0
      %p180 = por %p178, %p179
      %p181 = scmp.ne.s32.totalorder %s173, %s175
      %p182 = scmp.eq.s32.totalorder %s29, 1
      %p183 = por %p181, %p182
      %p184 = scmp.ne.s32.totalorder %s175, %s176
      %p185 = scmp.eq.s32.totalorder %s29, 0
      %p186 = por %p184, %p185
      %p187 = scmp.ne.s32.totalorder %s175, %s176
      %p188 = scmp.eq.s32.totalorder %s30, 1
      %p189 = por %p187, %p188
      %p191 = scmp.ne.s32.totalorder %s176, %s190
      %p192 = scmp.eq.s32.totalorder %s30, 0
      %p193 = por %p191, %p192
      %s194 = ssub.s32 %s31, %s43
      %s195 = ssub.s32 %s32, %s39
      %s196 = sor.u32 %s194, %s195
      %p197 = scmp.eq.s32.totalorder %s196, 0
      %s199 = sadd.s32 %s198, 1
      %s200 = scalar_select %p197, %s198, %s199
      %p203 = pneg %p197
      %p204 = scmp.eq.s32.totalorder %s24, 1
      %p205 = por %p203, %p204
      %p206 = scmp.ne.s32.totalorder %s198, %s201
      %p207 = scmp.eq.s32.totalorder %s24, 0
      %p208 = por %p206, %p207
      %p209 = scmp.ne.s32.totalorder %s198, %s201
      %p210 = scmp.eq.s32.totalorder %s29, 1
      %p211 = por %p209, %p210
      %p212 = scmp.ne.s32.totalorder %s201, %s202
      %p213 = scmp.eq.s32.totalorder %s29, 0
      %p214 = por %p212, %p213
      %p215 = scmp.ne.s32.totalorder %s201, %s202
      %p216 = scmp.eq.s32.totalorder %s30, 1
      %p217 = por %p215, %p216
      %p219 = scmp.ne.s32.totalorder %s202, %s218
      %p220 = scmp.eq.s32.totalorder %s30, 0
      %p221 = por %p219, %p220
      %p222 = scmp.le.s32.totalorder 1, %s24
      %p223 = scmp.lt.s32.totalorder %s24, 3
      %p224 = pnand %p222, %p223
      %p225 = pneg %p224
      // Predicated region
      $region9: #{tpu_custom_call.1} parent=5 // pred_check
        _
      $region10: #{tpu_custom_call.1} parent=5 // pred_check_branch
        %227 = sbr.rel (%p224) target = $region12
      $region11: #{tpu_custom_call.1} parent=5 // pred_region
        %s228 = ssub.s32 %s24, 1
        // Predicated region
        $region13: #{tpu_custom_call.1} parent=11 // pred_check
          %p229 = pneg %p165
        $region14: #{tpu_custom_call.1} parent=11 // pred_check_branch
          %231 = sbr.rel (%p229) target = $region16
        $region15: #{tpu_custom_call.1} parent=11 // pred_region
          %s233 = ssub.s32 1536, 1536
          %234 = vsyncadd [#allocation9], %s233
          %s235 = sshll.u32 [#allocation10], 4
          %s236 = int_to_ptr.vmem [resolvable:$true] %s235
          %241 = dma.hbm_to_vmem [thread:$0]  %s4, 1536, %s236, [#allocation9], 384, 384, 24
        $region16: #{tpu_custom_call.1} parent=11 // pred_fallthru
          _
        // Predicated region
        $region17: #{tpu_custom_call.1} parent=11 // pred_check
          %p242 = pneg %p186
        $region18: #{tpu_custom_call.1} parent=11 // pred_check_branch
          %244 = sbr.rel (%p242) target = $region20
        $region19: #{tpu_custom_call.1} parent=11 // pred_region
          _
        $region20: #{tpu_custom_call.1} parent=11 // pred_fallthru
          _
      $region12: #{tpu_custom_call.1} parent=5 // pred_fallthru
        _
      %p245 = scmp.lt.s32.totalorder %s24, 2
      // Predicated region
      $region21: #{tpu_custom_call.1} parent=5 // pred_check
        %p246 = pneg %p245
      $region22: #{tpu_custom_call.1} parent=5 // pred_check_branch
        %248 = sbr.rel (%p246) target = $region24
      $region23: #{tpu_custom_call.1} parent=5 // pred_region
        // Predicated region
        $region25: #{tpu_custom_call.1} parent=23 // pred_check
          %p249 = pneg %p58
        $region26: #{tpu_custom_call.1} parent=23 // pred_check_branch
          %251 = sbr.rel (%p249) target = $region28
        $region27: #{tpu_custom_call.1} parent=23 // pred_region
          %s252 = sand.u32 %s48, 1
          %s253 = scalar_lea.sflag [#allocation3], %s252
          %s254 = sand.u32 %s48, 1
          %s255 = smul.addr %s254, 8
          %s256 = scalar_lea.vmem [#allocation2], %s255
          %s258 = ssub.s32 128, 128
          %259 = vsyncadd %s253, %s258
          %s260 = sadd.s32 %s32, %s31
          %s261 = smul.addr %s260, 128
          %s262 = scalar_lea.hbm %s0, %s261
          %s264 = sshll.u32 %s256, 4
          %s265 = int_to_ptr.vmem [resolvable:$true] %s264
          %267 = dma.hbm_to_vmem [thread:$0]  %s262, 128, %s265, %s253
        $region28: #{tpu_custom_call.1} parent=23 // pred_fallthru
          _
        // Predicated region
        $region29: #{tpu_custom_call.1} parent=23 // pred_check
          %p268 = pneg %p84
        $region30: #{tpu_custom_call.1} parent=23 // pred_check_branch
          %270 = sbr.rel (%p268) target = $region32
        $region31: #{tpu_custom_call.1} parent=23 // pred_region
          %s271 = sand.u32 %s24, 1
          %s272 = scalar_lea.sflag [#allocation6], %s271
          %s273 = sand.u32 %s74, 1
          %s274 = smul.addr %s273, 8
          %s275 = scalar_lea.vmem [#allocation5], %s274
          %s277 = ssub.s32 128, 128
          %278 = vsyncadd %s272, %s277
          %s279 = smul.addr %s31, 128
          %s280 = scalar_lea.hbm %s1, %s279
          %s282 = sshll.u32 %s275, 4
          %s283 = int_to_ptr.vmem [resolvable:$true] %s282
          %285 = dma.hbm_to_vmem [thread:$0]  %s280, 128, %s283, %s272
        $region32: #{tpu_custom_call.1} parent=23 // pred_fallthru
          _
        // Predicated region
        $region33: #{tpu_custom_call.1} parent=23 // pred_check
          %p286 = pneg %p110
        $region34: #{tpu_custom_call.1} parent=23 // pred_check_branch
          %288 = sbr.rel (%p286) target = $region36
        $region35: #{tpu_custom_call.1} parent=23 // pred_region
          %s289 = sand.u32 %s24, 1
          %s290 = scalar_lea.sflag [#allocation6], %s289
          %s291 = sand.u32 %s100, 1
          %s292 = smul.addr %s291, 8
          %s293 = scalar_lea.vmem [#allocation7], %s292
          %s295 = ssub.s32 128, 128
          %296 = vsyncadd %s290, %s295
          %s297 = smul.addr %s31, 128
          %s298 = scalar_lea.hbm %s2, %s297
          %s300 = sshll.u32 %s293, 4
          %s301 = int_to_ptr.vmem [resolvable:$true] %s300
          %303 = dma.hbm_to_vmem [thread:$0]  %s298, 128, %s301, %s290
        $region36: #{tpu_custom_call.1} parent=23 // pred_fallthru
          _
        // Predicated region
        $region37: #{tpu_custom_call.1} parent=23 // pred_check
          %p304 = pneg %p138
        $region38: #{tpu_custom_call.1} parent=23 // pred_check_branch
          %306 = sbr.rel (%p304) target = $region40
        $region39: #{tpu_custom_call.1} parent=23 // pred_region
          %s307 = sand.u32 %s24, 1
          %s308 = scalar_lea.sflag [#allocation9], %s307
          %s309 = sand.u32 %s128, 1
          %s310 = smul.addr %s309, 8
          %s311 = scalar_lea.vmem [#allocation8], %s310
          %s313 = ssub.s32 128, 128
          %314 = vsyncadd %s308, %s313
          %s315 = sadd.s32 %s32, %s31
          %s316 = smul.addr %s315, 128
          %s317 = scalar_lea.hbm %s3, %s316
          %s319 = sshll.u32 %s311, 4
          %s320 = int_to_ptr.vmem [resolvable:$true] %s319
          %322 = dma.hbm_to_vmem [thread:$0]  %s317, 128, %s320, %s308
        $region40: #{tpu_custom_call.1} parent=23 // pred_fallthru
          _
      $region24: #{tpu_custom_call.1} parent=5 // pred_fallthru
        _
      %p323 = scmp.le.s32.totalorder 1, %s24
      %p324 = scmp.lt.s32.totalorder %s24, 3
      %p325 = pnand %p323, %p324
      %p326 = pneg %p325
      // Predicated region
      $region41: #{tpu_custom_call.1} parent=5 // pred_check
        _
      $region42: #{tpu_custom_call.1} parent=5 // pred_check_branch
        %328 = sbr.rel (%p325) target = $region44
      $region43: #{tpu_custom_call.1} parent=5 // pred_region
        %s329 = ssub.s32 %s24, 1
        %s330 = sand.u32 %s51, 1
        %s331 = scalar_lea.sflag [#allocation3], %s330
        %s332 = sand.u32 %s51, 1
        %s333 = smul.addr %s332, 8
        %s334 = scalar_lea.vmem [#allocation2], %s333
        // Predicated region
        $region45: #{tpu_custom_call.1} parent=43 // pred_check
          %p335 = pneg %p64
        $region46: #{tpu_custom_call.1} parent=43 // pred_check_branch
          %337 = sbr.rel (%p335) target = $region48
        $region47: #{tpu_custom_call.1} parent=43 // pred_region
          %338 = dma.done %s331, 128
        $region48: #{tpu_custom_call.1} parent=43 // pred_fallthru
          _
        %s339 = sand.u32 %s29, 1
        %s340 = scalar_lea.sflag [#allocation6], %s339
        %s341 = sand.u32 %s77, 1
        %s342 = smul.addr %s341, 8
        %s343 = scalar_lea.vmem [#allocation5], %s342
        // Predicated region
        $region49: #{tpu_custom_call.1} parent=43 // pred_check
          %p344 = pneg %p90
        $region50: #{tpu_custom_call.1} parent=43 // pred_check_branch
          %346 = sbr.rel (%p344) target = $region52
        $region51: #{tpu_custom_call.1} parent=43 // pred_region
          %347 = dma.done %s340, 128
        $region52: #{tpu_custom_call.1} parent=43 // pred_fallthru
          _
        %s348 = sand.u32 %s29, 1
        %s349 = scalar_lea.sflag [#allocation6], %s348
        %s350 = sand.u32 %s103, 1
        %s351 = smul.addr %s350, 8
        %s352 = scalar_lea.vmem [#allocation7], %s351
        // Predicated region
        $region53: #{tpu_custom_call.1} parent=43 // pred_check
          %p353 = pneg %p116
        $region54: #{tpu_custom_call.1} parent=43 // pred_check_branch
          %355 = sbr.rel (%p353) target = $region56
        $region55: #{tpu_custom_call.1} parent=43 // pred_region
          %356 = dma.done %s349, 128
        $region56: #{tpu_custom_call.1} parent=43 // pred_fallthru
          _
        %s357 = sand.u32 %s29, 1
        %s358 = scalar_lea.sflag [#allocation9], %s357
        %s359 = sand.u32 %s131, 1
        %s360 = smul.addr %s359, 8
        %s361 = scalar_lea.vmem [#allocation8], %s360
        // Predicated region
        $region57: #{tpu_custom_call.1} parent=43 // pred_check
          %p362 = pneg %p144
        $region58: #{tpu_custom_call.1} parent=43 // pred_check_branch
          %364 = sbr.rel (%p362) target = $region60
        $region59: #{tpu_custom_call.1} parent=43 // pred_region
          %365 = dma.done %s358, 128
        $region60: #{tpu_custom_call.1} parent=43 // pred_fallthru
          _
        // Predicated region
        $region61: #{tpu_custom_call.1} parent=43 // pred_check
          %p366 = pneg %p165
        $region62: #{tpu_custom_call.1} parent=43 // pred_check_branch
          %368 = sbr.rel (%p366) target = $region64
        $region63: #{tpu_custom_call.1} parent=43 // pred_region
          %369 = dma.done [#allocation9], 1536
        $region64: #{tpu_custom_call.1} parent=43 // pred_fallthru
          _
        %s370 = sand.u32 %s51, 1
        %s371 = scalar_lea.sflag [#allocation3], %s370
        %s372 = sand.u32 %s51, 1
        %s373 = smul.addr %s372, 8
        %s374 = scalar_lea.vmem [#allocation2], %s373
        %p375 = pneg %p64
        %p376 = pneg %p61
        %s377 = sand.u32 %s29, 1
        %s378 = scalar_lea.sflag [#allocation6], %s377
        %s379 = sand.u32 %s77, 1
        %s380 = smul.addr %s379, 8
        %s381 = scalar_lea.vmem [#allocation5], %s380
        %p382 = pneg %p90
        %p383 = pneg %p87
        %s384 = sand.u32 %s29, 1
        %s385 = scalar_lea.sflag [#allocation6], %s384
        %s386 = sand.u32 %s103, 1
        %s387 = smul.addr %s386, 8
        %s388 = scalar_lea.vmem [#allocation7], %s387
        %p389 = pneg %p116
        %p390 = pneg %p113
        %s391 = sand.u32 %s29, 1
        %s392 = scalar_lea.sflag [#allocation9], %s391
        %s393 = sand.u32 %s131, 1
        %s394 = smul.addr %s393, 8
        %s395 = scalar_lea.vmem [#allocation8], %s394
        %p396 = pneg %p144
        %p397 = pneg %p141
        %p398 = pneg %p165
        %p399 = pneg %p162
        %p400 = pneg %p186
        %p401 = pneg %p183
        %p402 = pneg %p214
        %p403 = pneg %p211
        %s404 = sand.u32 %s201, 1
        %s405 = scalar_lea.sflag [#allocation4], %s404
        %s406 = sand.u32 %s201, 1
        %s407 = smul.addr %s406, 8
        %s408 = scalar_lea.vmem [#allocation11], %s407
        %v409 = vld [vmem:[%s334] sm:$0xff]
        %v410 = vld [vmem:[%s343] sm:$0xff]
        %v411 = vld [vmem:[%s352] sm:$0xff]
        %v412 = vld [vmem:[%s361] sm:$0xff]
        %v413 = vld [vmem:[#allocation10] sm:$0xff]
        %v414 = vld [vmem:[#allocation10 + $0x18] sm:$0xff]
        %v415 = vld [vmem:[#allocation10 + $0x30] sm:$0xff]
        %v416 = vld [vmem:[#allocation10 + $0x48] sm:$0xff]
        %v417 = vld [vmem:[#allocation10 + $0x8] sm:$0xff]
        %v418 = vld [vmem:[#allocation10 + $0x20] sm:$0xff]
        %v419 = vld [vmem:[#allocation10 + $0x38] sm:$0xff]
        %v420 = vld [vmem:[#allocation10 + $0x50] sm:$0xff]
        %v421 = vld [vmem:[#allocation10 + $0x10] sm:$0xff]
        %v422 = vld [vmem:[#allocation10 + $0x28] sm:$0xff]
        %v423 = vld [vmem:[#allocation10 + $0x40] sm:$0xff]
        %v424 = vld [vmem:[#allocation10 + $0x58] sm:$0xff]
        %v425 = vld [vmem:[%s5] sm:$0x1]
        %v426 = vld [vmem:[%s5 + $0x1] sm:$0x1]
        %v427 = vld [vmem:[%s5 + $0x2] sm:$0x1]
        %v429 = vlaneseq
        %v430 = vshrl.u32 %v429, 7
        %v431 = vsub.s32 0, %v430
        %v432 = vrot.slane %v425, %v431
        %vm434 = vcmask 261120
        %v436 = vsel %vm434, %v409, 0
        %438 = vmatprep.subr.mxu0 0.0
        %439 = vmatpush1.msra.mxu0 0.0
        %440 = vmatprep.subr.mxu0 0.0
        %441 = vmatpush1.msra.mxu0 0.0
        %442 = vmatprep.subr.mxu0 0.0
        %443 = vmatpush1.msra.mxu0 0.0
        %444 = vmatprep.subr.mxu0 0.0
        %445 = vmatpush1.msra.mxu0 0.0
        %446 = vmatprep.subr.mxu0 0.0
        %447 = vmatpush1.msra.mxu0 0.0
        %448 = vmatprep.subr.mxu0 0.0
        %449 = vmatpush1.msra.mxu0 0.0
        %450 = vmatprep.subr.mxu0 0.0
        %451 = vmatpush1.msra.mxu0 0.0
        %452 = vmatprep.subr.mxu0 0.0
        %453 = vmatpush1.msra.mxu0 0.0
        %454 = vmatprep.subr.mxu0 0.0
        %455 = vmatpush1.msra.mxu0 0.0
        %456 = vmatprep.subr.mxu0 0.0
        %457 = vmatpush1.msra.mxu0 0.0
        %458 = vmatprep.subr.mxu0 0.0
        %459 = vmatpush1.msra.mxu0 0.0
        %460 = vmatprep.subr.mxu0 0.0
        %461 = vmatpush1.msra.mxu0 0.0
        %462 = vmatprep.subr.mxu0 0.0
        %463 = vmatpush1.msra.mxu0 %v416
        %464 = vmatprep.subr.mxu0 0.0
        %465 = vmatpush1.msra.mxu0 %v415
        %466 = vmatprep.subr.mxu0 0.0
        %467 = vmatpush1.msra.mxu0 %v414
        %468 = vmatprep.subr.mxu0 0.0
        %469 = vmatpush1.msra.mxu0 %v413
        %470 = vmatprep.subr.mxu0 0.0
        %471 = vmatpush2.msra.mxu0 0.0
        %472 = vmatprep.subr.mxu0 0.0
        %473 = vmatpush2.msra.mxu0 0.0
        %474 = vmatprep.subr.mxu0 0.0
        %475 = vmatpush2.msra.mxu0 0.0
        %476 = vmatprep.subr.mxu0 0.0
        %477 = vmatpush2.msra.mxu0 0.0
        %478 = vmatprep.subr.mxu0 0.0
        %479 = vmatpush2.msra.mxu0 0.0
        %480 = vmatprep.subr.mxu0 0.0
        %481 = vmatpush2.msra.mxu0 0.0
        %482 = vmatprep.subr.mxu0 0.0
        %483 = vmatpush2.msra.mxu0 0.0
        %484 = vmatprep.subr.mxu0 0.0
        %485 = vmatpush2.msra.mxu0 0.0
        %486 = vmatprep.subr.mxu0 0.0
        %487 = vmatpush2.msra.mxu0 0.0
        %488 = vmatprep.subr.mxu0 0.0
        %489 = vmatpush2.msra.mxu0 0.0
        %490 = vmatprep.subr.mxu0 0.0
        %491 = vmatpush2.msra.mxu0 0.0
        %492 = vmatprep.subr.mxu0 0.0
        %493 = vmatpush2.msra.mxu0 0.0
        %494 = vmatprep.subr.mxu0 0.0
        %495 = vmatpush2.msra.mxu0 0.0
        %496 = vmatprep.subr.mxu0 0.0
        %497 = vmatpush2.msra.mxu0 0.0
        %498 = vmatprep.subr.mxu0 0.0
        %499 = vmatpush2.msra.mxu0 0.0
        %500 = vmatprep.subr.mxu0 0.0
        %501 = vmatpush2.msra.mxu0 0.0
        %502 = vmatprep.mubr.f32.mxu0 0.0
        %503 = vmatmul.mubr.f32.gmra.mxu0 %v436
        %v504 = vpop.f32.mrf.mxu0
        %v505 = vadd.f32 %v432, %v504
        %v506 = vpop.f32.mrf.mxu0
        %507 = vdwg.mxu0
        %v508 = vmul.f32 %v505, 0.25
        %v510 = vlaneseq
        %v511 = vshrl.u32 %v510, 7
        %v512 = vsub.s32 0, %v511
        %v513 = vrot.slane %v426, %v512
        %v516 = vsel %vm434, %v410, 0
        %518 = vmatprep.subr.mxu0 0.0
        %519 = vmatpush1.msra.mxu0 0.0
        %520 = vmatprep.subr.mxu0 0.0
        %521 = vmatpush1.msra.mxu0 0.0
        %522 = vmatprep.subr.mxu0 0.0
        %523 = vmatpush1.msra.mxu0 0.0
        %524 = vmatprep.subr.mxu0 0.0
        %525 = vmatpush1.msra.mxu0 0.0
        %526 = vmatprep.subr.mxu0 0.0
        %527 = vmatpush1.msra.mxu0 0.0
        %528 = vmatprep.subr.mxu0 0.0
        %529 = vmatpush1.msra.mxu0 0.0
        %530 = vmatprep.subr.mxu0 0.0
        %531 = vmatpush1.msra.mxu0 0.0
        %532 = vmatprep.subr.mxu0 0.0
        %533 = vmatpush1.msra.mxu0 0.0
        %534 = vmatprep.subr.mxu0 0.0
        %535 = vmatpush1.msra.mxu0 0.0
        %536 = vmatprep.subr.mxu0 0.0
        %537 = vmatpush1.msra.mxu0 0.0
        %538 = vmatprep.subr.mxu0 0.0
        %539 = vmatpush1.msra.mxu0 0.0
        %540 = vmatprep.subr.mxu0 0.0
        %541 = vmatpush1.msra.mxu0 0.0
        %542 = vmatprep.subr.mxu0 0.0
        %543 = vmatpush1.msra.mxu0 %v420
        %544 = vmatprep.subr.mxu0 0.0
        %545 = vmatpush1.msra.mxu0 %v419
        %546 = vmatprep.subr.mxu0 0.0
        %547 = vmatpush1.msra.mxu0 %v418
        %548 = vmatprep.subr.mxu0 0.0
        %549 = vmatpush1.msra.mxu0 %v417
        %550 = vmatprep.subr.mxu0 0.0
        %551 = vmatpush2.msra.mxu0 0.0
        %552 = vmatprep.subr.mxu0 0.0
        %553 = vmatpush2.msra.mxu0 0.0
        %554 = vmatprep.subr.mxu0 0.0
        %555 = vmatpush2.msra.mxu0 0.0
        %556 = vmatprep.subr.mxu0 0.0
        %557 = vmatpush2.msra.mxu0 0.0
        %558 = vmatprep.subr.mxu0 0.0
        %559 = vmatpush2.msra.mxu0 0.0
        %560 = vmatprep.subr.mxu0 0.0
        %561 = vmatpush2.msra.mxu0 0.0
        %562 = vmatprep.subr.mxu0 0.0
        %563 = vmatpush2.msra.mxu0 0.0
        %564 = vmatprep.subr.mxu0 0.0
        %565 = vmatpush2.msra.mxu0 0.0
        %566 = vmatprep.subr.mxu0 0.0
        %567 = vmatpush2.msra.mxu0 0.0
        %568 = vmatprep.subr.mxu0 0.0
        %569 = vmatpush2.msra.mxu0 0.0
        %570 = vmatprep.subr.mxu0 0.0
        %571 = vmatpush2.msra.mxu0 0.0
        %572 = vmatprep.subr.mxu0 0.0
        %573 = vmatpush2.msra.mxu0 0.0
        %574 = vmatprep.subr.mxu0 0.0
        %575 = vmatpush2.msra.mxu0 0.0
        %576 = vmatprep.subr.mxu0 0.0
        %577 = vmatpush2.msra.mxu0 0.0
        %578 = vmatprep.subr.mxu0 0.0
        %579 = vmatpush2.msra.mxu0 0.0
        %580 = vmatprep.subr.mxu0 0.0
        %581 = vmatpush2.msra.mxu0 0.0
        %582 = vmatprep.mubr.f32.mxu0 0.0
        %583 = vmatmul.mubr.f32.gmra.mxu0 %v516
        %v584 = vpop.f32.mrf.mxu0
        %v585 = vadd.f32 %v513, %v584
        %v586 = vpop.f32.mrf.mxu0
        %587 = vdwg.mxu0
        %v589 = vlaneseq
        %v590 = vshrl.u32 %v589, 7
        %v591 = vsub.s32 0, %v590
        %v592 = vrot.slane %v427, %v591
        %v595 = vsel %vm434, %v411, 0
        %597 = vmatprep.subr.mxu0 0.0
        %598 = vmatpush1.msra.mxu0 0.0
        %599 = vmatprep.subr.mxu0 0.0
        %600 = vmatpush1.msra.mxu0 0.0
        %601 = vmatprep.subr.mxu0 0.0
        %602 = vmatpush1.msra.mxu0 0.0
        %603 = vmatprep.subr.mxu0 0.0
        %604 = vmatpush1.msra.mxu0 0.0
        %605 = vmatprep.subr.mxu0 0.0
        %606 = vmatpush1.msra.mxu0 0.0
        %607 = vmatprep.subr.mxu0 0.0
        %608 = vmatpush1.msra.mxu0 0.0
        %609 = vmatprep.subr.mxu0 0.0
        %610 = vmatpush1.msra.mxu0 0.0
        %611 = vmatprep.subr.mxu0 0.0
        %612 = vmatpush1.msra.mxu0 0.0
        %613 = vmatprep.subr.mxu0 0.0
        %614 = vmatpush1.msra.mxu0 0.0
        %615 = vmatprep.subr.mxu0 0.0
        %616 = vmatpush1.msra.mxu0 0.0
        %617 = vmatprep.subr.mxu0 0.0
        %618 = vmatpush1.msra.mxu0 0.0
        %619 = vmatprep.subr.mxu0 0.0
        %620 = vmatpush1.msra.mxu0 0.0
        %621 = vmatprep.subr.mxu0 0.0
        %622 = vmatpush1.msra.mxu0 %v424
        %623 = vmatprep.subr.mxu0 0.0
        %624 = vmatpush1.msra.mxu0 %v423
        %625 = vmatprep.subr.mxu0 0.0
        %626 = vmatpush1.msra.mxu0 %v422
        %627 = vmatprep.subr.mxu0 0.0
        %628 = vmatpush1.msra.mxu0 %v421
        %629 = vmatprep.subr.mxu0 0.0
        %630 = vmatpush2.msra.mxu0 0.0
        %631 = vmatprep.subr.mxu0 0.0
        %632 = vmatpush2.msra.mxu0 0.0
        %633 = vmatprep.subr.mxu0 0.0
        %634 = vmatpush2.msra.mxu0 0.0
        %635 = vmatprep.subr.mxu0 0.0
        %636 = vmatpush2.msra.mxu0 0.0
        %637 = vmatprep.subr.mxu0 0.0
        %638 = vmatpush2.msra.mxu0 0.0
        %639 = vmatprep.subr.mxu0 0.0
        %640 = vmatpush2.msra.mxu0 0.0
        %641 = vmatprep.subr.mxu0 0.0
        %642 = vmatpush2.msra.mxu0 0.0
        %643 = vmatprep.subr.mxu0 0.0
        %644 = vmatpush2.msra.mxu0 0.0
        %645 = vmatprep.subr.mxu0 0.0
        %646 = vmatpush2.msra.mxu0 0.0
        %647 = vmatprep.subr.mxu0 0.0
        %648 = vmatpush2.msra.mxu0 0.0
        %649 = vmatprep.subr.mxu0 0.0
        %650 = vmatpush2.msra.mxu0 0.0
        %651 = vmatprep.subr.mxu0 0.0
        %652 = vmatpush2.msra.mxu0 0.0
        %653 = vmatprep.subr.mxu0 0.0
        %654 = vmatpush2.msra.mxu0 0.0
        %655 = vmatprep.subr.mxu0 0.0
        %656 = vmatpush2.msra.mxu0 0.0
        %657 = vmatprep.subr.mxu0 0.0
        %658 = vmatpush2.msra.mxu0 0.0
        %659 = vmatprep.subr.mxu0 0.0
        %660 = vmatpush2.msra.mxu0 0.0
        %661 = vmatprep.mubr.f32.mxu0 0.0
        %662 = vmatmul.mubr.f32.gmra.mxu0 %v595
        %v663 = vpop.f32.mrf.mxu0
        %v664 = vadd.f32 %v592, %v663
        %v665 = vpop.f32.mrf.mxu0
        %666 = vdwg.mxu0
        %667 = vmatprep.subr.mxu0 0.0
        %668 = vmatpush1.xpose.msra.mxu0 0.0
        %669 = vmatprep.subr.mxu0 0.0
        %670 = vmatpush1.xpose.msra.mxu0 0.0
        %671 = vmatprep.subr.mxu0 0.0
        %672 = vmatpush1.xpose.msra.mxu0 0.0
        %673 = vmatprep.subr.mxu0 0.0
        %674 = vmatpush1.xpose.msra.mxu0 0.0
        %675 = vmatprep.subr.mxu0 0.0
        %676 = vmatpush1.xpose.msra.mxu0 0.0
        %677 = vmatprep.subr.mxu0 0.0
        %678 = vmatpush1.xpose.msra.mxu0 0.0
        %679 = vmatprep.subr.mxu0 0.0
        %680 = vmatpush1.xpose.msra.mxu0 0.0
        %681 = vmatprep.subr.mxu0 0.0
        %682 = vmatpush1.xpose.msra.mxu0 0.0
        %683 = vmatprep.subr.mxu0 0.0
        %684 = vmatpush1.xpose.msra.mxu0 0.0
        %685 = vmatprep.subr.mxu0 0.0
        %686 = vmatpush1.xpose.msra.mxu0 0.0
        %687 = vmatprep.subr.mxu0 0.0
        %688 = vmatpush1.xpose.msra.mxu0 0.0
        %689 = vmatprep.subr.mxu0 0.0
        %690 = vmatpush1.xpose.msra.mxu0 0.0
        %691 = vmatprep.subr.mxu0 0.0
        %692 = vmatpush1.xpose.msra.mxu0 0.0
        %693 = vmatprep.subr.mxu0 0.0
        %694 = vmatpush1.xpose.msra.mxu0 0.0
        %695 = vmatprep.subr.mxu0 0.0
        %696 = vmatpush1.xpose.msra.mxu0 0.0
        %697 = vmatprep.subr.mxu0 0.0
        %698 = vmatpush1.xpose.msra.mxu0 %v585
        %699 = vmatprep.subr.mxu0 0.0
        %700 = vmatpush2.xpose.msra.mxu0 0.0
        %701 = vmatprep.subr.mxu0 0.0
        %702 = vmatpush2.xpose.msra.mxu0 0.0
        %703 = vmatprep.subr.mxu0 0.0
        %704 = vmatpush2.xpose.msra.mxu0 0.0
        %705 = vmatprep.subr.mxu0 0.0
        %706 = vmatpush2.xpose.msra.mxu0 0.0
        %707 = vmatprep.subr.mxu0 0.0
        %708 = vmatpush2.xpose.msra.mxu0 0.0
        %709 = vmatprep.subr.mxu0 0.0
        %710 = vmatpush2.xpose.msra.mxu0 0.0
        %711 = vmatprep.subr.mxu0 0.0
        %712 = vmatpush2.xpose.msra.mxu0 0.0
        %713 = vmatprep.subr.mxu0 0.0
        %714 = vmatpush2.xpose.msra.mxu0 0.0
        %715 = vmatprep.subr.mxu0 0.0
        %716 = vmatpush2.xpose.msra.mxu0 0.0
        %717 = vmatprep.subr.mxu0 0.0
        %718 = vmatpush2.xpose.msra.mxu0 0.0
        %719 = vmatprep.subr.mxu0 0.0
        %720 = vmatpush2.xpose.msra.mxu0 0.0
        %721 = vmatprep.subr.mxu0 0.0
        %722 = vmatpush2.xpose.msra.mxu0 0.0
        %723 = vmatprep.subr.mxu0 0.0
        %724 = vmatpush2.xpose.msra.mxu0 0.0
        %725 = vmatprep.subr.mxu0 0.0
        %726 = vmatpush2.xpose.msra.mxu0 0.0
        %727 = vmatprep.subr.mxu0 0.0
        %728 = vmatpush2.xpose.msra.mxu0 0.0
        %729 = vmatprep.subr.mxu0 0.0
        %730 = vmatpush2.xpose.msra.mxu0 0.0
        %731 = vmatprep.mubr.f32.mxu0 0.0
        %732 = vmatmul.mubr.f32.gmra.mxu0 %v508
        %v733 = vpop.f32.mrf.mxu0
        %v734 = vadd.f32 %v412, %v733
        %v735 = vpop.f32.mrf.mxu0
        %736 = vdwg.mxu0
        %vm737 = vcmask 64512
        %v738 = vsel %vm737, %v734, -inf
        %739 = vmax.xlane.f32.xlu0 %v738
        %v740 = vpop.xlane.xlu0 %739
        %v741 = vsub.f32 %v734, %v740
        %v742 = vmul.f32 %v741, 1.442695
        %v743 = vpow.pop %v742
        %v744 = vsel %vm737, %v743, 0.0
        %745 = vadd.xlane.f32.xlu0 %v744
        %v746 = vpop.xlane.xlu0 %745
        %v747 = vrcp.pop %v746
        %v748 = vmul.f32 %v743, %v747
        %v750 = vsel %vm737, %v748, 0
        %752 = vmatprep.subr.mxu0 0.0
        %753 = vmatpush1.msra.mxu0 0.0
        %754 = vmatprep.subr.mxu0 0.0
        %755 = vmatpush1.msra.mxu0 0.0
        %756 = vmatprep.subr.mxu0 0.0
        %757 = vmatpush1.msra.mxu0 0.0
        %758 = vmatprep.subr.mxu0 0.0
        %759 = vmatpush1.msra.mxu0 0.0
        %760 = vmatprep.subr.mxu0 0.0
        %761 = vmatpush1.msra.mxu0 0.0
        %762 = vmatprep.subr.mxu0 0.0
        %763 = vmatpush1.msra.mxu0 0.0
        %764 = vmatprep.subr.mxu0 0.0
        %765 = vmatpush1.msra.mxu0 0.0
        %766 = vmatprep.subr.mxu0 0.0
        %767 = vmatpush1.msra.mxu0 0.0
        %768 = vmatprep.subr.mxu0 0.0
        %769 = vmatpush1.msra.mxu0 0.0
        %770 = vmatprep.subr.mxu0 0.0
        %771 = vmatpush1.msra.mxu0 0.0
        %772 = vmatprep.subr.mxu0 0.0
        %773 = vmatpush1.msra.mxu0 0.0
        %774 = vmatprep.subr.mxu0 0.0
        %775 = vmatpush1.msra.mxu0 0.0
        %776 = vmatprep.subr.mxu0 0.0
        %777 = vmatpush1.msra.mxu0 0.0
        %778 = vmatprep.subr.mxu0 0.0
        %779 = vmatpush1.msra.mxu0 0.0
        %780 = vmatprep.subr.mxu0 0.0
        %781 = vmatpush1.msra.mxu0 0.0
        %782 = vmatprep.subr.mxu0 0.0
        %783 = vmatpush1.msra.mxu0 %v664
        %784 = vmatprep.subr.mxu0 0.0
        %785 = vmatpush2.msra.mxu0 0.0
        %786 = vmatprep.subr.mxu0 0.0
        %787 = vmatpush2.msra.mxu0 0.0
        %788 = vmatprep.subr.mxu0 0.0
        %789 = vmatpush2.msra.mxu0 0.0
        %790 = vmatprep.subr.mxu0 0.0
        %791 = vmatpush2.msra.mxu0 0.0
        %792 = vmatprep.subr.mxu0 0.0
        %793 = vmatpush2.msra.mxu0 0.0
        %794 = vmatprep.subr.mxu0 0.0
        %795 = vmatpush2.msra.mxu0 0.0
        %796 = vmatprep.subr.mxu0 0.0
        %797 = vmatpush2.msra.mxu0 0.0
        %798 = vmatprep.subr.mxu0 0.0
        %799 = vmatpush2.msra.mxu0 0.0
        %800 = vmatprep.subr.mxu0 0.0
        %801 = vmatpush2.msra.mxu0 0.0
        %802 = vmatprep.subr.mxu0 0.0
        %803 = vmatpush2.msra.mxu0 0.0
        %804 = vmatprep.subr.mxu0 0.0
        %805 = vmatpush2.msra.mxu0 0.0
        %806 = vmatprep.subr.mxu0 0.0
        %807 = vmatpush2.msra.mxu0 0.0
        %808 = vmatprep.subr.mxu0 0.0
        %809 = vmatpush2.msra.mxu0 0.0
        %810 = vmatprep.subr.mxu0 0.0
        %811 = vmatpush2.msra.mxu0 0.0
        %812 = vmatprep.subr.mxu0 0.0
        %813 = vmatpush2.msra.mxu0 0.0
        %814 = vmatprep.subr.mxu0 0.0
        %815 = vmatpush2.msra.mxu0 0.0
        %816 = vmatprep.mubr.f32.mxu0 0.0
        %817 = vmatmul.mubr.f32.gmra.mxu0 %v750
        %v818 = vpop.f32.mrf.mxu0
        %v819 = vadd.f32 0.0, %v818
        %v820 = vpop.f32.mrf.mxu0
        %821 = vdwg.mxu0
        %822 = vst [vmem:[%s408] sm:$0xff] %v819
        %s823 = sand.u32 %s201, 1
        %s824 = scalar_lea.sflag [#allocation4], %s823
        %s825 = sand.u32 %s201, 1
        %s826 = smul.addr %s825, 8
        %s827 = scalar_lea.vmem [#allocation11], %s826
        // Predicated region
        $region65: #{tpu_custom_call.1} parent=43 // pred_check
          %p828 = pneg %p211
        $region66: #{tpu_custom_call.1} parent=43 // pred_check_branch
          %830 = sbr.rel (%p828) target = $region68
        $region67: #{tpu_custom_call.1} parent=43 // pred_region
          %s832 = ssub.s32 128, 128
          %833 = vsyncadd %s824, %s832
          %s834 = sadd.s32 %s34, %s33
          %s835 = smul.addr %s834, 128
          %s836 = scalar_lea.hbm %s6, %s835
          %s838 = sshll.u32 %s827, 4
          %s839 = int_to_ptr.vmem [resolvable:$true] %s838
          %841 = dma.vmem_to_hbm [thread:$0]  %s839, 128, %s836, %s824
        $region68: #{tpu_custom_call.1} parent=43 // pred_fallthru
          _
      $region44: #{tpu_custom_call.1} parent=5 // pred_fallthru
        _
      %p842 = scmp.le.s32.totalorder 2, %s24
      // Predicated region
      $region69: #{tpu_custom_call.1} parent=5 // pred_check
        %p843 = pneg %p842
      $region70: #{tpu_custom_call.1} parent=5 // pred_check_branch
        %845 = sbr.rel (%p843) target = $region72
      $region71: #{tpu_custom_call.1} parent=5 // pred_region
        %s846 = ssub.s32 %s24, 2
        // Predicated region
        $region73: #{tpu_custom_call.1} parent=71 // pred_check
          %p847 = pneg %p217
        $region74: #{tpu_custom_call.1} parent=71 // pred_check_branch
          %849 = sbr.rel (%p847) target = $region76
        $region75: #{tpu_custom_call.1} parent=71 // pred_region
          %s850 = sand.u32 %s202, 1
          %s851 = scalar_lea.sflag [#allocation4], %s850
          %s852 = sand.u32 %s202, 1
          %s853 = smul.addr %s852, 8
          %s854 = scalar_lea.vmem [#allocation11], %s853
          %855 = dma.done %s851, 128
        $region76: #{tpu_custom_call.1} parent=71 // pred_fallthru
          _
      $region72: #{tpu_custom_call.1} parent=5 // pred_fallthru
        _
    $region6: #{tpu_custom_call.1} parent=1 // loop_footer
      %s28 = sadd.s32 1, %s24
    $region7: #{tpu_custom_call.1} parent=1 // loop_footer_branch
      %23 = sbr.rel target = $region3
    $region8: #{tpu_custom_call.1} parent=1 // loop_exit
      _
    %856 = vsyncpa [#allocation3], 1
    %s857 = scalar_lea.sflag [#allocation3], 1
    %858 = vsyncpa %s857, 1
    %859 = vsyncpa [#allocation6], 1
    %s860 = scalar_lea.sflag [#allocation6], 1
    %861 = vsyncpa %s860, 1
    %862 = vsyncpa [#allocation9], 1
    %s863 = scalar_lea.sflag [#allocation9], 1
    %864 = vsyncpa %s863, 1
    %865 = vsyncpa [#allocation4], 1
    %s866 = scalar_lea.sflag [#allocation4], 1
    %867 = vsyncpa %s866, 1

</llo_original>
